<compile_context>
chip_gen: v7x
topology: tpu7x:2x2x1
jax: 0.10.0
libtpu: 0.0.40
codegen_flags: <defaults>
</compile_context>

<pallas_src>
import jax
import jax.numpy as jnp
from jax.experimental import pallas as pl
from jax.experimental.pallas import tpu as pltpu


def fused_conv3_kernel(x_ref, w_ref, c_ref, o_ref):
    """Fused conv3(conv2(conv1(x))) + other as one affine map.

    x_ref: (N, Cin, Ho, Wo) f32 VMEM  -- input already zero-padded by 3 px.
    w_ref: (Cout, Cin)      f32 SMEM  -- composed weight (W1 @ W2 @ W3)^T.
    c_ref: (3, Cout)        f32 SMEM  -- [ring0, ring1, interior] constants.
    o_ref: (N, Cout, Ho, Wo) f32 VMEM
    """
    _, cin, ho, wo = x_ref.shape
    cout = o_ref.shape[1]

    x = x_ref[...]  # whole (tiny) input block, single VMEM load

    # Ring index of every output pixel (0 = outermost padding ring).
    row = jax.lax.broadcasted_iota(jnp.int32, (ho, wo), 0)
    col = jax.lax.broadcasted_iota(jnp.int32, (ho, wo), 1)
    ring = jnp.minimum(jnp.minimum(row, ho - 1 - row),
                       jnp.minimum(col, wo - 1 - col))
    is_r0 = ring == 0
    is_r1 = ring == 1

    chans = []
    for c in range(cout):              # Cout == 2: static unroll
        # VPU scalar-broadcast MAC over the Cin=3 input channels.
        acc = w_ref[c, 0] * x[:, 0, :, :]
        for k in range(1, cin):
            acc = acc + w_ref[c, k] * x[:, k, :, :]
        # Per-pixel additive constant: border rings vs. interior.
        bias_img = jnp.where(is_r0, c_ref[0, c],
                             jnp.where(is_r1, c_ref[1, c], c_ref[2, c]))
        chans.append(acc + bias_img[None, :, :])

    o_ref[...] = jnp.stack(chans, axis=1)   # (N, Cout, Ho, Wo), single store


def model_forward(x_nchw, params, other=1.0):
    """Equivalent of Model.forward(x, other) with padding1=padding2=None."""
    w1, b1 = params["w1"], params["b1"]     # (3, 7), (7,)
    w2, b2 = params["w2"], params["b2"]     # (7, 8), (8,)
    w3, b3 = params["w3"], params["b3"]     # (8, 2), (2,)
    other = jnp.asarray(other, jnp.float32)

    # Compose the three pointwise convs once (tiny parameter preprocessing).
    w23 = w2 @ w3                            # (7, 2)
    w_comp = w1 @ w23                        # (3, 2)
    c_ring0 = b3 + other                     # conv3 applied to zeros
    c_ring1 = b2 @ w3 + b3 + other           # conv3 applied to conv2's zero ring
    c_inter = b1 @ w23 + c_ring1             # conv1's zero ring == interior const
    consts = jnp.stack([c_ring0, c_ring1, c_inter], axis=0)   # (3, Cout)
    w_cf = w_comp.T                          # (Cout, Cin), channel-first

    # TODO(synk): the padding1/padding2 != None branch of the PyTorch forward
    # (scalar adds between convs) is not implemented; defaults are None.

    n, cin, h, w = x_nchw.shape
    cout = w3.shape[-1]
    ho, wo = h + 6, w + 6
    # Single 3-px zero pad: on those rings the x-contribution is exactly 0, so
    # one full-size affine map reproduces all three convs' borders exactly.
    xp = jnp.pad(x_nchw, ((0, 0), (0, 0), (3, 3), (3, 3)))

    return pl.pallas_call(
        fused_conv3_kernel,
        out_shape=jax.ShapeDtypeStruct((n, cout, ho, wo), jnp.float32),
        in_specs=[
            pl.BlockSpec(memory_space=pltpu.MemorySpace.VMEM),   # padded input
            pl.BlockSpec(memory_space=pltpu.MemorySpace.SMEM),   # composed W
            pl.BlockSpec(memory_space=pltpu.MemorySpace.SMEM),   # ring consts
        ],
        out_specs=pl.BlockSpec(memory_space=pltpu.MemorySpace.VMEM),
    )(xp.astype(jnp.float32), w_cf.astype(jnp.float32),
      consts.astype(jnp.float32))


def reference_forward(x_nchw, params, other=1.0):
    """Plain-JAX reference: three sequential 1x1 convs with padding=1."""
    def conv1x1_pad1(x, w, b):
        xp = jnp.pad(x, ((0, 0), (0, 0), (1, 1), (1, 1)))
        return jnp.einsum("nchw,cd->ndhw", xp, w) + b.reshape(1, -1, 1, 1)

    v1 = conv1x1_pad1(x_nchw, params["w1"], params["b1"])
    v2 = conv1x1_pad1(v1, params["w2"], params["b2"])
    v3 = conv1x1_pad1(v2, params["w3"], params["b3"])
    return v3 + other


def init_params(key):
    # torch Conv2d(Cin, Cout, 1) default init: U(-1/sqrt(fan_in), 1/sqrt(fan_in)),
    # fan_in = Cin*1*1.  Weights stored as (Cin, Cout) matrices (matmul view).
    def conv_init(k, cin, cout):
        kw, kb = jax.random.split(k)
        bound = 1.0 / jnp.sqrt(cin)
        w = jax.random.uniform(kw, (cin, cout), jnp.float32, -bound, bound)
        b = jax.random.uniform(kb, (cout,), jnp.float32, -bound, bound)
        return w, b

    k1, k2, k3 = jax.random.split(key, 3)
    w1, b1 = conv_init(k1, 3, 7)
    w2, b2 = conv_init(k2, 7, 8)
    w3, b3 = conv_init(k3, 8, 2)
    return {"w1": w1, "b1": b1, "w2": w2, "b2": b2, "w3": w3, "b3": b3}


if __name__ == "__main__":
    key = jax.random.PRNGKey(0)
    kx, kp = jax.random.split(key)
    # small shapes consistent with the module's (N, 3, H, W) input
    x = jax.random.normal(kx, (2, 3, 16, 16), jnp.float32)
    params = init_params(kp)

    forward = jax.jit(model_forward)
    out = jax.block_until_ready(forward(x, params))

    ref = reference_forward(x, params, other=1.0)
    assert out.shape == (2, 2, 22, 22), out.shape
    assert jnp.allclose(out, ref, atol=1e-4, rtol=1e-4), float(
        jnp.max(jnp.abs(out - ref)))
    print("KERNEL_OK")
</pallas_src>

<mosaic_0001>
module attributes {stable_mosaic.version = 11 : i64} {
  func.func @fused_conv3_kernel(%arg0: memref<2x3x22x22xf32, #tpu.memory_space<vmem>>, %arg1: memref<2x3xf32, #tpu.memory_space<smem>>, %arg2: memref<3x2xf32, #tpu.memory_space<smem>>, %arg3: memref<2x2x22x22xf32, #tpu.memory_space<vmem>>) attributes {dimension_semantics = [], scalar_prefetch = 0 : i64, scratch_operands = 0 : i64, tpu.core_type = #tpu.core_type<tc>} {
    %c0 = arith.constant 0 : index
    %c0_0 = arith.constant 0 : index
    %c0_1 = arith.constant 0 : index
    %c0_2 = arith.constant 0 : index
    %0 = vector.load %arg0[%c0, %c0_0, %c0_1, %c0_2] : memref<2x3x22x22xf32, #tpu.memory_space<vmem>>, vector<2x3x22x22xf32>
    %1 = tpu.iota {dimensions = array<i32: 0>} : vector<22x22xi32>
    %2 = tpu.iota {dimensions = array<i32: 1>} : vector<22x22xi32>
    %c21_i32 = arith.constant 21 : i32
    %3 = vector.broadcast %c21_i32 : i32 to vector<22x22xi32>
    %4 = arith.subi %3, %1 : vector<22x22xi32>
    %5 = arith.minsi %1, %4 : vector<22x22xi32>
    %c21_i32_3 = arith.constant 21 : i32
    %6 = vector.broadcast %c21_i32_3 : i32 to vector<22x22xi32>
    %7 = arith.subi %6, %2 : vector<22x22xi32>
    %8 = arith.minsi %2, %7 : vector<22x22xi32>
    %9 = arith.minsi %5, %8 : vector<22x22xi32>
    %c0_i32 = arith.constant 0 : i32
    %10 = vector.broadcast %c0_i32 : i32 to vector<22x22xi32>
    %11 = arith.cmpi eq, %9, %10 : vector<22x22xi32>
    %c1_i32 = arith.constant 1 : i32
    %12 = vector.broadcast %c1_i32 : i32 to vector<22x22xi32>
    %13 = arith.cmpi eq, %9, %12 : vector<22x22xi32>
    %c0_4 = arith.constant 0 : index
    %c0_5 = arith.constant 0 : index
    %14 = memref.load %arg1[%c0_4, %c0_5] : memref<2x3xf32, #tpu.memory_space<smem>>
    %15 = vector.extract_strided_slice %0 {offsets = [0, 0, 0, 0], sizes = [2, 1, 22, 22], strides = [1, 1, 1, 1]} : vector<2x3x22x22xf32> to vector<2x1x22x22xf32>
    %16 = vector.shape_cast %15 : vector<2x1x22x22xf32> to vector<2x22x22xf32>
    %17 = vector.broadcast %14 : f32 to vector<2x22x22xf32>
    %18 = arith.mulf %17, %16 : vector<2x22x22xf32>
    %c0_6 = arith.constant 0 : index
    %c1 = arith.constant 1 : index
    %19 = memref.load %arg1[%c0_6, %c1] : memref<2x3xf32, #tpu.memory_space<smem>>
    %20 = vector.extract_strided_slice %0 {offsets = [0, 1, 0, 0], sizes = [2, 1, 22, 22], strides = [1, 1, 1, 1]} : vector<2x3x22x22xf32> to vector<2x1x22x22xf32>
    %21 = vector.shape_cast %20 : vector<2x1x22x22xf32> to vector<2x22x22xf32>
    %22 = vector.broadcast %19 : f32 to vector<2x22x22xf32>
    %23 = arith.mulf %22, %21 : vector<2x22x22xf32>
    %24 = arith.addf %18, %23 : vector<2x22x22xf32>
    %c0_7 = arith.constant 0 : index
    %c2 = arith.constant 2 : index
    %25 = memref.load %arg1[%c0_7, %c2] : memref<2x3xf32, #tpu.memory_space<smem>>
    %26 = vector.extract_strided_slice %0 {offsets = [0, 2, 0, 0], sizes = [2, 1, 22, 22], strides = [1, 1, 1, 1]} : vector<2x3x22x22xf32> to vector<2x1x22x22xf32>
    %27 = vector.shape_cast %26 : vector<2x1x22x22xf32> to vector<2x22x22xf32>
    %28 = vector.broadcast %25 : f32 to vector<2x22x22xf32>
    %29 = arith.mulf %28, %27 : vector<2x22x22xf32>
    %30 = arith.addf %24, %29 : vector<2x22x22xf32>
    %c0_8 = arith.constant 0 : index
    %c0_9 = arith.constant 0 : index
    %31 = memref.load %arg2[%c0_8, %c0_9] : memref<3x2xf32, #tpu.memory_space<smem>>
    %c1_10 = arith.constant 1 : index
    %c0_11 = arith.constant 0 : index
    %32 = memref.load %arg2[%c1_10, %c0_11] : memref<3x2xf32, #tpu.memory_space<smem>>
    %c2_12 = arith.constant 2 : index
    %c0_13 = arith.constant 0 : index
    %33 = memref.load %arg2[%c2_12, %c0_13] : memref<3x2xf32, #tpu.memory_space<smem>>
    %34 = vector.broadcast %32 : f32 to vector<22x22xf32>
    %35 = vector.broadcast %33 : f32 to vector<22x22xf32>
    %36 = arith.select %13, %34, %35 : vector<22x22xi1>, vector<22x22xf32>
    %37 = vector.broadcast %31 : f32 to vector<22x22xf32>
    %38 = arith.select %11, %37, %36 : vector<22x22xi1>, vector<22x22xf32>
    %39 = vector.shape_cast %38 : vector<22x22xf32> to vector<1x22x22xf32>
    %40 = vector.broadcast %39 : vector<1x22x22xf32> to vector<2x22x22xf32>
    %41 = arith.addf %30, %40 : vector<2x22x22xf32>
    %c1_14 = arith.constant 1 : index
    %c0_15 = arith.constant 0 : index
    %42 = memref.load %arg1[%c1_14, %c0_15] : memref<2x3xf32, #tpu.memory_space<smem>>
    %43 = vector.extract_strided_slice %0 {offsets = [0, 0, 0, 0], sizes = [2, 1, 22, 22], strides = [1, 1, 1, 1]} : vector<2x3x22x22xf32> to vector<2x1x22x22xf32>
    %44 = vector.shape_cast %43 : vector<2x1x22x22xf32> to vector<2x22x22xf32>
    %45 = vector.broadcast %42 : f32 to vector<2x22x22xf32>
    %46 = arith.mulf %45, %44 : vector<2x22x22xf32>
    %c1_16 = arith.constant 1 : index
    %c1_17 = arith.constant 1 : index
    %47 = memref.load %arg1[%c1_16, %c1_17] : memref<2x3xf32, #tpu.memory_space<smem>>
    %48 = vector.extract_strided_slice %0 {offsets = [0, 1, 0, 0], sizes = [2, 1, 22, 22], strides = [1, 1, 1, 1]} : vector<2x3x22x22xf32> to vector<2x1x22x22xf32>
    %49 = vector.shape_cast %48 : vector<2x1x22x22xf32> to vector<2x22x22xf32>
    %50 = vector.broadcast %47 : f32 to vector<2x22x22xf32>
    %51 = arith.mulf %50, %49 : vector<2x22x22xf32>
    %52 = arith.addf %46, %51 : vector<2x22x22xf32>
    %c1_18 = arith.constant 1 : index
    %c2_19 = arith.constant 2 : index
    %53 = memref.load %arg1[%c1_18, %c2_19] : memref<2x3xf32, #tpu.memory_space<smem>>
    %54 = vector.extract_strided_slice %0 {offsets = [0, 2, 0, 0], sizes = [2, 1, 22, 22], strides = [1, 1, 1, 1]} : vector<2x3x22x22xf32> to vector<2x1x22x22xf32>
    %55 = vector.shape_cast %54 : vector<2x1x22x22xf32> to vector<2x22x22xf32>
    %56 = vector.broadcast %53 : f32 to vector<2x22x22xf32>
    %57 = arith.mulf %56, %55 : vector<2x22x22xf32>
    %58 = arith.addf %52, %57 : vector<2x22x22xf32>
    %c0_20 = arith.constant 0 : index
    %c1_21 = arith.constant 1 : index
    %59 = memref.load %arg2[%c0_20, %c1_21] : memref<3x2xf32, #tpu.memory_space<smem>>
    %c1_22 = arith.constant 1 : index
    %c1_23 = arith.constant 1 : index
    %60 = memref.load %arg2[%c1_22, %c1_23] : memref<3x2xf32, #tpu.memory_space<smem>>
    %c2_24 = arith.constant 2 : index
    %c1_25 = arith.constant 1 : index
    %61 = memref.load %arg2[%c2_24, %c1_25] : memref<3x2xf32, #tpu.memory_space<smem>>
    %62 = vector.broadcast %60 : f32 to vector<22x22xf32>
    %63 = vector.broadcast %61 : f32 to vector<22x22xf32>
    %64 = arith.select %13, %62, %63 : vector<22x22xi1>, vector<22x22xf32>
    %65 = vector.broadcast %59 : f32 to vector<22x22xf32>
    %66 = arith.select %11, %65, %64 : vector<22x22xi1>, vector<22x22xf32>
    %67 = vector.shape_cast %66 : vector<22x22xf32> to vector<1x22x22xf32>
    %68 = vector.broadcast %67 : vector<1x22x22xf32> to vector<2x22x22xf32>
    %69 = arith.addf %58, %68 : vector<2x22x22xf32>
    %70 = vector.shape_cast %41 : vector<2x22x22xf32> to vector<2x1x22x22xf32>
    %71 = vector.shape_cast %69 : vector<2x22x22xf32> to vector<2x1x22x22xf32>
    %72 = tpu.concatenate %70, %71 in 1 : vector<2x1x22x22xf32>, vector<2x1x22x22xf32> -> vector<2x2x22x22xf32>
    %c0_26 = arith.constant 0 : index
    %c0_27 = arith.constant 0 : index
    %c0_28 = arith.constant 0 : index
    %c0_29 = arith.constant 0 : index
    %73 = vector.load %arg3[%c0_26, %c0_27, %c0_28, %c0_29] : memref<2x2x22x22xf32, #tpu.memory_space<vmem>>, vector<2x2x22x22xf32>
    tpu.vector_store %arg3[%c0_26, %c0_27, %c0_28, %c0_29], %72 {strides = array<i32>} : memref<2x2x22x22xf32, #tpu.memory_space<vmem>>, vector<2x2x22x22xf32>,
    return
  }
}

</mosaic_0001>

<llo_original>
// kernel: model_forward.1
$region0: #{model_forward.1}
  #allocation0 [shape = 'u32[]', space=smem, size = 0x4, offset = 0x4, fixed_abs, tag = 'smem constant byte address 0x4 - core index']
  #allocation1 [shape = 'u32[144,128]{1,0:T(1,128)}', space=vmem, size = 0x12000, scoped, tag = 'internal scratch']
  %s0 = inlined_call_operand.vmem [shape: f32[2,3,22,22], index: 0, kind: input, shape index: {}]
  %s1 = inlined_call_operand.vmem [shape: f32[2,3], index: 1, kind: input, shape index: {}]
  %s2 = inlined_call_operand.vmem [shape: f32[3,2], index: 2, kind: input, shape index: {}]
  %s3 = inlined_call_operand.vmem [shape: f32[2,2,22,22], index: 3, kind: output, shape index: {}]
  %s4 = sld [smem:[#allocation0]]
  $region30: #{model_forward.1} parent=0
    _
  %s6 = ssub.s32 1, %s4
  %s7 = scalar_select 0, %s6, %s4
  $region1: #{model_forward.1} parent=0
    #allocation2 [shape = 'u8[1024]{0}', space=smem, size = 0x400, scoped, tag = 'input window, operand 1, single buffered']
    #allocation3 [shape = 's32[1]{0}', space=sflag, size = 0x4, scoped, tag = 'scoped memory for model_forward.1']
    #allocation4 [shape = 'u8[2048]{0}', space=smem, size = 0x800, scoped, tag = 'input window, operand 2, single buffered']
    #allocation5 [shape = 's32[1]{0}', space=sflag, size = 0x4, scoped, tag = 'scoped memory for model_forward.1']
    %8 = vsyncpa [#allocation3], 0
    %9 = vsyncpa [#allocation5], 0
    // Predicated region
    $region2: #{model_forward.1} parent=1 // pred_check
      _
    $region3: #{model_forward.1} parent=1 // pred_check_branch
      %11 = sbr.rel (0) target = $region5
    $region4: #{model_forward.1} parent=1 // pred_region
      _
    $region5: #{model_forward.1} parent=1 // pred_fallthru
      _
    // Predicated region
    $region6: #{model_forward.1} parent=1 // pred_check
      _
    $region7: #{model_forward.1} parent=1 // pred_check_branch
      %13 = sbr.rel (0) target = $region9
    $region8: #{model_forward.1} parent=1 // pred_region
      %s15 = ssub.s32 32, 32
      %16 = vsyncadd [#allocation3], %s15
      %s18 = sshll.u32 %s1, 4
      %s19 = int_to_ptr.vmem [resolvable:$true] %s18
      %21 = dma.vmem_to_smem %s19, 32, [#allocation2], [#allocation3]
    $region9: #{model_forward.1} parent=1 // pred_fallthru
      _
    // Predicated region
    $region10: #{model_forward.1} parent=1 // pred_check
      _
    $region11: #{model_forward.1} parent=1 // pred_check_branch
      %23 = sbr.rel (0) target = $region13
    $region12: #{model_forward.1} parent=1 // pred_region
      %s25 = ssub.s32 64, 64
      %26 = vsyncadd [#allocation5], %s25
      %s28 = sshll.u32 %s2, 4
      %s29 = int_to_ptr.vmem [resolvable:$true] %s28
      %31 = dma.vmem_to_smem %s29, 64, [#allocation4], [#allocation5]
    $region13: #{model_forward.1} parent=1 // pred_fallthru
      _
    // Predicated region
    $region14: #{model_forward.1} parent=1 // pred_check
      _
    $region15: #{model_forward.1} parent=1 // pred_check_branch
      %33 = sbr.rel (0) target = $region17
    $region16: #{model_forward.1} parent=1 // pred_region
      %34 = dma.done [#allocation3], 32
    $region17: #{model_forward.1} parent=1 // pred_fallthru
      _
    // Predicated region
    $region18: #{model_forward.1} parent=1 // pred_check
      _
    $region19: #{model_forward.1} parent=1 // pred_check_branch
      %36 = sbr.rel (0) target = $region21
    $region20: #{model_forward.1} parent=1 // pred_region
      %37 = dma.done [#allocation5], 64
    $region21: #{model_forward.1} parent=1 // pred_fallthru
      _
    %38 = sfence
    %v39 = vld [vmem:[%s0] sm:$0xff]
    %v40 = vld [vmem:[%s0 + $0x8] sm:$0xff]
    %v41 = vld [vmem:[%s0 + $0x10] sm:$0x3f]
    %v42 = vld [vmem:[%s0 + $0x18] sm:$0xff]
    %v43 = vld [vmem:[%s0 + $0x20] sm:$0xff]
    %v44 = vld [vmem:[%s0 + $0x28] sm:$0x3f]
    %v45 = vld [vmem:[%s0 + $0x30] sm:$0xff]
    %v46 = vld [vmem:[%s0 + $0x38] sm:$0xff]
    %v47 = vld [vmem:[%s0 + $0x40] sm:$0x3f]
    %v48 = vld [vmem:[%s0 + $0x48] sm:$0xff]
    %v49 = vld [vmem:[%s0 + $0x50] sm:$0xff]
    %v50 = vld [vmem:[%s0 + $0x58] sm:$0x3f]
    %v51 = vld [vmem:[%s0 + $0x60] sm:$0xff]
    %v52 = vld [vmem:[%s0 + $0x68] sm:$0xff]
    %v53 = vld [vmem:[%s0 + $0x70] sm:$0x3f]
    %v54 = vld [vmem:[%s0 + $0x78] sm:$0xff]
    %v55 = vld [vmem:[%s0 + $0x80] sm:$0xff]
    %v56 = vld [vmem:[%s0 + $0x88] sm:$0x3f]
    %v57 = vlaneseq
    %v58 = vshrl.u32 %v57, 7
    %v59 = vadd.s32 %v58, 8
    %v60 = vadd.s32 %v58, 16
    %v61 = vlaneseq
    %v62 = vand.u32 %v61, 127
    %v63 = vsub.s32 21, %v58
    %v64 = vsub.s32 21, %v59
    %v65 = vsub.s32 21, %v60
    %vm66 = vcmp.lt.s32.totalorder %v58, %v63
    %v67 = vsel %vm66, %v58, %v63
    %vm68 = vcmp.lt.s32.totalorder %v59, %v64
    %v69 = vsel %vm68, %v59, %v64
    %vm70 = vcmp.lt.s32.totalorder %v60, %v65
    %v71 = vsel %vm70, %v60, %v65
    %v72 = vsub.s32 21, %v62
    %vm73 = vcmp.lt.s32.totalorder %v62, %v72
    %v74 = vsel %vm73, %v62, %v72
    %vm75 = vcmp.lt.s32.totalorder %v67, %v74
    %v76 = vsel %vm75, %v67, %v74
    %vm77 = vcmp.lt.s32.totalorder %v69, %v74
    %v78 = vsel %vm77, %v69, %v74
    %vm79 = vcmp.lt.s32.totalorder %v71, %v74
    %v80 = vsel %vm79, %v71, %v74
    %vm81 = vcmp.eq.s32.totalorder %v76, 0
    %vm82 = vcmp.eq.s32.totalorder %v78, 0
    %vm83 = vcmp.eq.s32.totalorder %v80, 0
    %vm84 = vcmp.eq.s32.totalorder %v76, 1
    %vm85 = vcmp.eq.s32.totalorder %v78, 1
    %vm86 = vcmp.eq.s32.totalorder %v80, 1
    %s87 = sld [smem:[#allocation2]]
    %v88 = vstv %s87
    %v89 = vmul.f32 %v88, %v39
    %v90 = vmul.f32 %v88, %v40
    %v91 = vmul.f32 %v88, %v41
    %v92 = vmul.f32 %v88, %v48
    %v93 = vmul.f32 %v88, %v49
    %v94 = vmul.f32 %v88, %v50
    %s95 = sld [smem:[#allocation2 + $0x1]]
    %v96 = vstv %s95
    %v97 = vmul.f32 %v96, %v42
    %v98 = vmul.f32 %v96, %v43
    %v99 = vmul.f32 %v96, %v44
    %v100 = vmul.f32 %v96, %v51
    %v101 = vmul.f32 %v96, %v52
    %v102 = vmul.f32 %v96, %v53
    %v103 = vadd.f32 %v89, %v97
    %v104 = vadd.f32 %v90, %v98
    %v105 = vadd.f32 %v91, %v99
    %v106 = vadd.f32 %v92, %v100
    %v107 = vadd.f32 %v93, %v101
    %v108 = vadd.f32 %v94, %v102
    %s109 = sld [smem:[#allocation2 + $0x2]]
    %v110 = vstv %s109
    %v111 = vmul.f32 %v110, %v45
    %v112 = vmul.f32 %v110, %v46
    %v113 = vmul.f32 %v110, %v47
    %v114 = vmul.f32 %v110, %v54
    %v115 = vmul.f32 %v110, %v55
    %v116 = vmul.f32 %v110, %v56
    %v117 = vadd.f32 %v103, %v111
    %v118 = vadd.f32 %v104, %v112
    %v119 = vadd.f32 %v105, %v113
    %v120 = vadd.f32 %v106, %v114
    %v121 = vadd.f32 %v107, %v115
    %v122 = vadd.f32 %v108, %v116
    %s123 = sld [smem:[#allocation4]]
    %s124 = sld [smem:[#allocation4 + $0x80]]
    %s125 = sld [smem:[#allocation4 + $0x100]]
    %v126 = vstv %s124
    %v127 = vstv %s125
    %v128 = vsel %vm84, %v126, %v127
    %v129 = vsel %vm85, %v126, %v127
    %v130 = vsel %vm86, %v126, %v127
    %v131 = vstv %s123
    %v132 = vsel %vm81, %v131, %v128
    %v133 = vsel %vm82, %v131, %v129
    %v134 = vsel %vm83, %v131, %v130
    %v135 = vadd.f32 %v117, %v132
    %v136 = vadd.f32 %v118, %v133
    %v137 = vadd.f32 %v119, %v134
    %v138 = vadd.f32 %v120, %v132
    %v139 = vadd.f32 %v121, %v133
    %v140 = vadd.f32 %v122, %v134
    %s141 = sld [smem:[#allocation2 + $0x80]]
    %v142 = vstv %s141
    %v143 = vmul.f32 %v142, %v39
    %v144 = vmul.f32 %v142, %v40
    %v145 = vmul.f32 %v142, %v41
    %v146 = vmul.f32 %v142, %v48
    %v147 = vmul.f32 %v142, %v49
    %v148 = vmul.f32 %v142, %v50
    %s149 = sld [smem:[#allocation2 + $0x81]]
    %v150 = vstv %s149
    %v151 = vmul.f32 %v150, %v42
    %v152 = vmul.f32 %v150, %v43
    %v153 = vmul.f32 %v150, %v44
    %v154 = vmul.f32 %v150, %v51
    %v155 = vmul.f32 %v150, %v52
    %v156 = vmul.f32 %v150, %v53
    %v157 = vadd.f32 %v143, %v151
    %v158 = vadd.f32 %v144, %v152
    %v159 = vadd.f32 %v145, %v153
    %v160 = vadd.f32 %v146, %v154
    %v161 = vadd.f32 %v147, %v155
    %v162 = vadd.f32 %v148, %v156
    %s163 = sld [smem:[#allocation2 + $0x82]]
    %v164 = vstv %s163
    %v165 = vmul.f32 %v164, %v45
    %v166 = vmul.f32 %v164, %v46
    %v167 = vmul.f32 %v164, %v47
    %v168 = vmul.f32 %v164, %v54
    %v169 = vmul.f32 %v164, %v55
    %v170 = vmul.f32 %v164, %v56
    %v171 = vadd.f32 %v157, %v165
    %v172 = vadd.f32 %v158, %v166
    %v173 = vadd.f32 %v159, %v167
    %v174 = vadd.f32 %v160, %v168
    %v175 = vadd.f32 %v161, %v169
    %v176 = vadd.f32 %v162, %v170
    %s177 = sld [smem:[#allocation4 + $0x1]]
    %s178 = sld [smem:[#allocation4 + $0x81]]
    %s179 = sld [smem:[#allocation4 + $0x101]]
    %v180 = vstv %s178
    %v181 = vstv %s179
    %v182 = vsel %vm84, %v180, %v181
    %v183 = vsel %vm85, %v180, %v181
    %v184 = vsel %vm86, %v180, %v181
    %v185 = vstv %s177
    %v186 = vsel %vm81, %v185, %v182
    %v187 = vsel %vm82, %v185, %v183
    %v188 = vsel %vm83, %v185, %v184
    %v189 = vadd.f32 %v171, %v186
    %v190 = vadd.f32 %v172, %v187
    %v191 = vadd.f32 %v173, %v188
    %v192 = vadd.f32 %v174, %v186
    %v193 = vadd.f32 %v175, %v187
    %v194 = vadd.f32 %v176, %v188
    %vm195 = vcmask 179200
    %196 = vst.msk [vmem:[%s3] sm:$0xff] %vm195, %v135
    %197 = vst.msk [vmem:[%s3 + $0x8] sm:$0xff] %vm195, %v136
    %vm198 = vcmask 177152
    %199 = vst.msk [vmem:[%s3 + $0x10] sm:$0x3f] %vm198, %v137
    %200 = vst.msk [vmem:[%s3 + $0x18] sm:$0xff] %vm195, %v189
    %201 = vst.msk [vmem:[%s3 + $0x20] sm:$0xff] %vm195, %v190
    %202 = vst.msk [vmem:[%s3 + $0x28] sm:$0x3f] %vm198, %v191
    %203 = vst.msk [vmem:[%s3 + $0x30] sm:$0xff] %vm195, %v138
    %204 = vst.msk [vmem:[%s3 + $0x38] sm:$0xff] %vm195, %v139
    %205 = vst.msk [vmem:[%s3 + $0x40] sm:$0x3f] %vm198, %v140
    %206 = vst.msk [vmem:[%s3 + $0x48] sm:$0xff] %vm195, %v192
    %207 = vst.msk [vmem:[%s3 + $0x50] sm:$0xff] %vm195, %v193
    %208 = vst.msk [vmem:[%s3 + $0x58] sm:$0x3f] %vm198, %v194
    // Predicated region
    $region22: #{model_forward.1} parent=1 // pred_check
      _
    $region23: #{model_forward.1} parent=1 // pred_check_branch
      %210 = sbr.rel (0) target = $region25
    $region24: #{model_forward.1} parent=1 // pred_region
      _
    $region25: #{model_forward.1} parent=1 // pred_fallthru
      _
    // Predicated region
    $region26: #{model_forward.1} parent=1 // pred_check
      _
    $region27: #{model_forward.1} parent=1 // pred_check_branch
      %212 = sbr.rel (0) target = $region29
    $region28: #{model_forward.1} parent=1 // pred_region
      _
    $region29: #{model_forward.1} parent=1 // pred_fallthru
      _
    %213 = vsyncpa [#allocation3], 1
    %214 = vsyncpa [#allocation5], 1

</llo_original>
